<compile_context>
chip_gen: v6e
topology: v6e:2x2x1
jax: 0.10.0
libtpu: 0.0.40
codegen_flags: <defaults>
</compile_context>

<pallas_src>
import jax
import jax.numpy as jnp
from jax.experimental import pallas as pl
from jax.experimental.pallas import tpu as pltpu


def attn_forward(x, attn_weight, attn_bias, attn2_weight):
    """x: (B, S, H); attn_weight: (O, H); attn_bias: (O,); attn2_weight: (O, O)."""
    B, S, H = x.shape
    O = attn_weight.shape[0]
    assert H == O, "Attn.forward applies self.attn twice -> hidden_size must equal output_size"

    wa_t = attn_weight.T.astype(jnp.float32)                 # (H, O) == W^T
    ba = attn_bias.astype(jnp.float32)                       # (O,)

    # Fold the repeated Linear once, in f32, outside the kernel (tiny 32x32):
    #   (x @ W^T + b) @ W^T + b  ==  x @ (W^T W^T) + (b @ W^T + b)
    # Cast the folded weight once to bf16 for the MXU; keep the bias in f32.
    wa2 = (wa_t @ wa_t).astype(jnp.bfloat16)                  # (H, O)
    b2 = (ba @ wa_t + ba).reshape(1, O)                       # (1, O) f32
    w2_t = attn2_weight.T.astype(jnp.bfloat16)                # (O, O)

    # Flatten batch into matmul rows: one (B*S, H) @ (H, O) chain.
    x2d = x.reshape(B * S, H).astype(jnp.bfloat16)            # (B*S, H) bf16

    def kernel(x_ref, wa2_ref, b2_ref, w2_ref, o_ref):
        """Single-block kernel (whole problem resident in VMEM).

        x_ref:   (B*S, H) bf16   flattened input rows
        wa2_ref: (H, O)   bf16   folded weight  Wa^T @ Wa^T
        b2_ref:  (1, O)   f32    folded bias    b @ Wa^T + b
        w2_ref:  (O, O)   bf16   attn2.weight transposed
        o_ref:   (B*S, O) f32    output (reshaped to (B, S, O) by the wrapper)
        """
        xv = x_ref[...]                                                  # (B*S, H) bf16

        # tanh(attn(attn(x))): bf16 MXU operands, f32 accumulation, f32 tanh.
        y2 = jnp.tanh(
            jnp.dot(xv, wa2_ref[...], preferred_element_type=jnp.float32)
            + b2_ref[...]
        )                                                                # (B*S, O) f32
        logits = jnp.dot(
            y2.astype(jnp.bfloat16), w2_ref[...],
            preferred_element_type=jnp.float32,
        )                                                                # (B*S, O) f32

        # F.softmax with no dim on a 3-D tensor -> softmax over dim 0 (batch).
        # View the flat logits as (B, S, O) in vregs and reduce over axis 0.
        z = logits.reshape(B, S, O)
        m = jnp.max(z, axis=0, keepdims=True)                            # (1, S, O)
        e = jnp.exp(z - m)                                               # (B, S, O)
        denom = jnp.sum(e, axis=0, keepdims=True)                        # (1, S, O), in [1, B]
        sm = e * pl.reciprocal(denom, approx=True)                       # EUP; softmax over batch

        # Renormalize over the last (output) dim: exact divide (cheap, safe).
        row_sum = jnp.sum(sm, axis=-1, keepdims=True)                    # (B, S, 1)
        out = sm / row_sum                                               # (B, S, O)

        # Single contiguous lane-dense store of the whole result.
        o_ref[...] = out.reshape(B * S, O)

    out2d = pl.pallas_call(
        kernel,
        out_shape=jax.ShapeDtypeStruct((B * S, O), jnp.float32),
        in_specs=[pl.BlockSpec(memory_space=pltpu.MemorySpace.VMEM)] * 4,
        out_specs=pl.BlockSpec(memory_space=pltpu.MemorySpace.VMEM),
    )(x2d, wa2, b2, w2_t)

    return out2d.reshape(B, S, O)


def attn_reference(x, attn_weight, attn_bias, attn2_weight):
    """Pure-JAX f32 reference mirroring the PyTorch forward (unfused, unfolded)."""
    y1 = x @ attn_weight.T + attn_bias
    y2 = jnp.tanh(y1 @ attn_weight.T + attn_bias)
    y3 = y2 @ attn2_weight.T
    sm = jax.nn.softmax(y3, axis=0)                           # implicit dim=0 for 3-D input
    return sm / jnp.sum(sm, axis=-1, keepdims=True)


if __name__ == "__main__":
    # Small shapes consistent with the module: hidden_size == output_size == 32.
    B, S, H = 2, 8, 32
    O = H

    key = jax.random.PRNGKey(0)
    kx, kw1, kb1, kw2 = jax.random.split(key, 4)

    x = jax.random.normal(kx, (B, S, H), dtype=jnp.float32)

    # Deterministic parameter init mimicking nn.Linear's U(-1/sqrt(fan_in), 1/sqrt(fan_in)).
    bound_a = 1.0 / (H ** 0.5)
    attn_weight = jax.random.uniform(kw1, (O, H), jnp.float32, -bound_a, bound_a)
    attn_bias = jax.random.uniform(kb1, (O,), jnp.float32, -bound_a, bound_a)
    bound_2 = 1.0 / (O ** 0.5)
    attn2_weight = jax.random.uniform(kw2, (O, O), jnp.float32, -bound_2, bound_2)

    out = attn_forward(x, attn_weight, attn_bias, attn2_weight)
    out = jax.block_until_ready(out)

    ref = attn_reference(x, attn_weight, attn_bias, attn2_weight)
    assert out.shape == (B, S, O)

    # Error budget: bf16 MXU operands (rel ~2^-9 on logits of magnitude <~1)
    # dominate; the approximate EUP reciprocal on a denominator in [1, B] and
    # the f32 weight fold add a few e-4 relative. Outputs average ~1/O, so the
    # absolute error on them stays well below 5e-3; 1e-2 gives margin while
    # still catching any structural bug (those show up at ~3e-2+).
    assert jnp.allclose(out, ref, atol=1e-2, rtol=1e-2), "Pallas kernel mismatch vs reference"

    print("KERNEL_OK")
</pallas_src>

<mosaic_0001>
module attributes {stable_mosaic.version = 11 : i64} {
  func.func @kernel(%arg0: memref<16x32xbf16, #tpu.memory_space<vmem>>, %arg1: memref<32x32xbf16, #tpu.memory_space<vmem>>, %arg2: memref<1x32xf32, #tpu.memory_space<vmem>>, %arg3: memref<32x32xbf16, #tpu.memory_space<vmem>>, %arg4: memref<16x32xf32, #tpu.memory_space<vmem>>) attributes {dimension_semantics = [], scalar_prefetch = 0 : i64, scratch_operands = 0 : i64, tpu.core_type = #tpu.core_type<tc>} {
    %c0 = arith.constant 0 : index
    %c0_0 = arith.constant 0 : index
    %0 = vector.load %arg0[%c0, %c0_0] : memref<16x32xbf16, #tpu.memory_space<vmem>>, vector<16x32xbf16>
    %c0_1 = arith.constant 0 : index
    %c0_2 = arith.constant 0 : index
    %1 = vector.load %arg1[%c0_1, %c0_2] : memref<32x32xbf16, #tpu.memory_space<vmem>>, vector<32x32xbf16>
    %cst = arith.constant dense<0.000000e+00> : vector<16x32xf32>
    %2 = tpu.matmul %0, %1, %cst {dimension_numbers = #tpu.dot_dimension_numbers<[1], [0], [0], [1], [0, 0, 1, 1], [], []>} : vector<16x32xbf16>, vector<32x32xbf16>, vector<16x32xf32> -> vector<16x32xf32>
    %c0_3 = arith.constant 0 : index
    %c0_4 = arith.constant 0 : index
    %3 = vector.load %arg2[%c0_3, %c0_4] : memref<1x32xf32, #tpu.memory_space<vmem>>, vector<1x32xf32>
    %4 = vector.broadcast %3 : vector<1x32xf32> to vector<16x32xf32>
    %5 = arith.addf %2, %4 : vector<16x32xf32>
    %6 = math.tanh %5 : vector<16x32xf32>
    %7 = arith.truncf %6 : vector<16x32xf32> to vector<16x32xbf16>
    %c0_5 = arith.constant 0 : index
    %c0_6 = arith.constant 0 : index
    %8 = vector.load %arg3[%c0_5, %c0_6] : memref<32x32xbf16, #tpu.memory_space<vmem>>, vector<32x32xbf16>
    %cst_7 = arith.constant dense<0.000000e+00> : vector<16x32xf32>
    %9 = tpu.matmul %7, %8, %cst_7 {dimension_numbers = #tpu.dot_dimension_numbers<[1], [0], [0], [1], [0, 0, 1, 1], [], []>} : vector<16x32xbf16>, vector<32x32xbf16>, vector<16x32xf32> -> vector<16x32xf32>
    %10 = vector.shape_cast %9 : vector<16x32xf32> to vector<2x8x32xf32>
    %cst_8 = arith.constant dense<0xFF800000> : vector<8x32xf32>
    %11 = vector.multi_reduction <maximumf>, %10, %cst_8 [0] : vector<2x8x32xf32> to vector<8x32xf32>
    %12 = vector.shape_cast %11 : vector<8x32xf32> to vector<1x8x32xf32>
    %13 = vector.broadcast %12 : vector<1x8x32xf32> to vector<2x8x32xf32>
    %14 = arith.subf %10, %13 : vector<2x8x32xf32>
    %15 = math.exp %14 : vector<2x8x32xf32>
    %cst_9 = arith.constant dense<0.000000e+00> : vector<8x32xf32>
    %16 = vector.multi_reduction <add>, %15, %cst_9 [0] : vector<2x8x32xf32> to vector<8x32xf32>
    %17 = vector.shape_cast %16 : vector<8x32xf32> to vector<1x8x32xf32>
    %18 = tpu.reciprocal %17 {approx = true} : vector<1x8x32xf32> -> vector<1x8x32xf32>
    %19 = vector.broadcast %18 : vector<1x8x32xf32> to vector<2x8x32xf32>
    %20 = arith.mulf %15, %19 : vector<2x8x32xf32>
    %cst_10 = arith.constant dense<0.000000e+00> : vector<2x8xf32>
    %21 = vector.multi_reduction <add>, %20, %cst_10 [2] : vector<2x8x32xf32> to vector<2x8xf32>
    %22 = vector.shape_cast %21 : vector<2x8xf32> to vector<2x8x1xf32>
    %23 = vector.broadcast %22 : vector<2x8x1xf32> to vector<2x8x32xf32>
    %24 = arith.divf %20, %23 : vector<2x8x32xf32>
    %25 = vector.shape_cast %24 : vector<2x8x32xf32> to vector<16x32xf32>
    %c0_11 = arith.constant 0 : index
    %c0_12 = arith.constant 0 : index
    %26 = vector.load %arg4[%c0_11, %c0_12] : memref<16x32xf32, #tpu.memory_space<vmem>>, vector<16x32xf32>
    tpu.vector_store %arg4[%c0_11, %c0_12], %25 {strides = array<i32>} : memref<16x32xf32, #tpu.memory_space<vmem>>, vector<16x32xf32>,
    return
  }
}

</mosaic_0001>

<llo_original>
// kernel: tpu_custom_call.1
$region0: #{tpu_custom_call.1}
  #allocation0 [shape = 'u32[]', space=smem, size = 0x4, offset = 0x4, fixed_abs, tag = 'smem constant byte address 0x4 - core index']
  #allocation1 [shape = 'u32[144,128]{1,0:T(1,128)}', space=vmem, size = 0x12000, scoped, tag = 'internal scratch']
  %s0 = inlined_call_operand.hbm [shape: bf16[16,32], index: 0, kind: input, shape index: {}]
  %s1 = inlined_call_operand.hbm [shape: bf16[32,32], index: 1, kind: input, shape index: {}]
  %s2 = inlined_call_operand.vmem [shape: f32[1,32], index: 2, kind: input, shape index: {}]
  %s3 = inlined_call_operand.hbm [shape: bf16[32,32], index: 3, kind: input, shape index: {}]
  %s4 = inlined_call_operand.hbm [shape: f32[16,32], index: 4, kind: output, shape index: {}]
  %s5 = sld [smem:[#allocation0]]
  $region38: #{tpu_custom_call.1} parent=0
    _
  %s7 = ssub.s32 1, %s5
  %s8 = scalar_select 0, %s7, %s5
  $region1: #{tpu_custom_call.1} parent=0
    #allocation2 [shape = 'u8[4096]{0}', space=vmem, size = 0x1000, scoped, tag = 'input window, operand 0, single buffered']
    #allocation3 [shape = 's32[1]{0}', space=sflag, size = 0x4, scoped, tag = 'scoped memory for tpu_custom_call.1']
    #allocation4 [shape = 's32[1]{0}', space=sflag, size = 0x4, scoped, tag = 'scoped memory for tpu_custom_call.1']
    #allocation5 [shape = 'u8[8192]{0}', space=vmem, size = 0x2000, scoped, tag = 'input window, operand 1, single buffered']
    #allocation6 [shape = 's32[1]{0}', space=sflag, size = 0x4, scoped, tag = 'scoped memory for tpu_custom_call.1']
    #allocation7 [shape = 'u8[8192]{0}', space=vmem, size = 0x2000, scoped, tag = 'input window, operand 3, single buffered']
    #allocation8 [shape = 'u8[8192]{0}', space=vmem, size = 0x2000, scoped, tag = 'output window, operand 0, single buffered']
    %9 = vsyncpa [#allocation3], 0
    %10 = vsyncpa [#allocation6], 0
    %11 = vsyncpa [#allocation4], 0
    // Predicated region
    $region2: #{tpu_custom_call.1} parent=1 // pred_check
      _
    $region3: #{tpu_custom_call.1} parent=1 // pred_check_branch
      %13 = sbr.rel (0) target = $region5
    $region4: #{tpu_custom_call.1} parent=1 // pred_region
      %s15 = ssub.s32 128, 128
      %16 = vsyncadd [#allocation3], %s15
      %s17 = sshll.u32 [#allocation2], 4
      %s18 = int_to_ptr.vmem [resolvable:$true] %s17
      %23 = dma.hbm_to_vmem [thread:$0]  %s0, 128, %s18, [#allocation3], 64, 64, 4
    $region5: #{tpu_custom_call.1} parent=1 // pred_fallthru
      _
    // Predicated region
    $region6: #{tpu_custom_call.1} parent=1 // pred_check
      _
    $region7: #{tpu_custom_call.1} parent=1 // pred_check_branch
      %25 = sbr.rel (0) target = $region9
    $region8: #{tpu_custom_call.1} parent=1 // pred_region
      %s27 = ssub.s32 256, 256
      %28 = vsyncadd [#allocation6], %s27
      %s29 = sshll.u32 [#allocation5], 4
      %s30 = int_to_ptr.vmem [resolvable:$true] %s29
      %35 = dma.hbm_to_vmem [thread:$0]  %s1, 256, %s30, [#allocation6], 64, 64, 4
    $region9: #{tpu_custom_call.1} parent=1 // pred_fallthru
      _
    // Predicated region
    $region10: #{tpu_custom_call.1} parent=1 // pred_check
      _
    $region11: #{tpu_custom_call.1} parent=1 // pred_check_branch
      %37 = sbr.rel (0) target = $region13
    $region12: #{tpu_custom_call.1} parent=1 // pred_region
      _
    $region13: #{tpu_custom_call.1} parent=1 // pred_fallthru
      _
    // Predicated region
    $region14: #{tpu_custom_call.1} parent=1 // pred_check
      _
    $region15: #{tpu_custom_call.1} parent=1 // pred_check_branch
      %39 = sbr.rel (0) target = $region17
    $region16: #{tpu_custom_call.1} parent=1 // pred_region
      %s41 = ssub.s32 256, 256
      %42 = vsyncadd [#allocation6], %s41
      %s43 = sshll.u32 [#allocation7], 4
      %s44 = int_to_ptr.vmem [resolvable:$true] %s43
      %49 = dma.hbm_to_vmem [thread:$0]  %s3, 256, %s44, [#allocation6], 64, 64, 4
    $region17: #{tpu_custom_call.1} parent=1 // pred_fallthru
      _
    // Predicated region
    $region18: #{tpu_custom_call.1} parent=1 // pred_check
      _
    $region19: #{tpu_custom_call.1} parent=1 // pred_check_branch
      %51 = sbr.rel (0) target = $region21
    $region20: #{tpu_custom_call.1} parent=1 // pred_region
      %52 = dma.done [#allocation3], 128
    $region21: #{tpu_custom_call.1} parent=1 // pred_fallthru
      _
    // Predicated region
    $region22: #{tpu_custom_call.1} parent=1 // pred_check
      _
    $region23: #{tpu_custom_call.1} parent=1 // pred_check_branch
      %54 = sbr.rel (0) target = $region25
    $region24: #{tpu_custom_call.1} parent=1 // pred_region
      %55 = dma.done [#allocation6], 256
    $region25: #{tpu_custom_call.1} parent=1 // pred_fallthru
      _
    // Predicated region
    $region26: #{tpu_custom_call.1} parent=1 // pred_check
      _
    $region27: #{tpu_custom_call.1} parent=1 // pred_check_branch
      %57 = sbr.rel (0) target = $region29
    $region28: #{tpu_custom_call.1} parent=1 // pred_region
      %58 = dma.done [#allocation6], 256
    $region29: #{tpu_custom_call.1} parent=1 // pred_fallthru
      _
    %v60 = vld [vmem:[#allocation2] sm:$0xf]
    %v61 = vld [vmem:[#allocation2 + $0x4] sm:$0xf]
    %v62 = vld [vmem:[#allocation5] sm:$0xf]
    %v63 = vld [vmem:[#allocation5 + $0x4] sm:$0xf]
    %v64 = vld [vmem:[#allocation5 + $0x8] sm:$0xf]
    %v65 = vld [vmem:[#allocation5 + $0xc] sm:$0xf]
    %v66 = vld [vmem:[%s2] sm:$0x1]
    %v68 = vlaneseq
    %v69 = vshrl.u32 %v68, 7
    %v70 = vsub.s32 0, %v69
    %v71 = vrot.slane %v66, %v70
    %v75 = vunpack.c.l.b16 %v60
    %v76 = vunpack.c.l.b16 %v61
    %v77 = vpack.c.b16 %v76, %v75
    %v82 = vunpack.c.l.b16 %v62
    %v83 = vunpack.c.l.b16 %v63
    %v84 = vunpack.c.l.b16 %v64
    %v85 = vunpack.c.l.b16 %v65
    %v86 = vpack.c.b16 %v83, %v82
    %v87 = vpack.c.b16 %v85, %v84
    %vm90 = vcmask 261120
    %v92 = vsel %vm90, %v77, 0
    %94 = vmatprep.subr.bf16.mxu0 0
    %95 = vmatpush1.bf16.msra.mxu0 0
    %96 = vmatprep.subr.bf16.mxu0 0
    %97 = vmatpush1.bf16.msra.mxu0 0
    %98 = vmatprep.subr.bf16.mxu0 0
    %99 = vmatpush1.bf16.msra.mxu0 0
    %100 = vmatprep.subr.bf16.mxu0 0
    %101 = vmatpush1.bf16.msra.mxu0 0
    %102 = vmatprep.subr.bf16.mxu0 0
    %103 = vmatpush1.bf16.msra.mxu0 0
    %104 = vmatprep.subr.bf16.mxu0 0
    %105 = vmatpush1.bf16.msra.mxu0 0
    %106 = vmatprep.subr.bf16.mxu0 0
    %107 = vmatpush1.bf16.msra.mxu0 %v87
    %108 = vmatprep.subr.bf16.mxu0 0
    %109 = vmatpush1.bf16.msra.mxu0 %v86
    %110 = vmatprep.subr.bf16.mxu0 0
    %111 = vmatpush2.bf16.msra.mxu0 0
    %112 = vmatprep.subr.bf16.mxu0 0
    %113 = vmatpush2.bf16.msra.mxu0 0
    %114 = vmatprep.subr.bf16.mxu0 0
    %115 = vmatpush2.bf16.msra.mxu0 0
    %116 = vmatprep.subr.bf16.mxu0 0
    %117 = vmatpush2.bf16.msra.mxu0 0
    %118 = vmatprep.subr.bf16.mxu0 0
    %119 = vmatpush2.bf16.msra.mxu0 0
    %120 = vmatprep.subr.bf16.mxu0 0
    %121 = vmatpush2.bf16.msra.mxu0 0
    %122 = vmatprep.subr.bf16.mxu0 0
    %123 = vmatpush2.bf16.msra.mxu0 0
    %124 = vmatprep.subr.bf16.mxu0 0
    %125 = vmatpush2.bf16.msra.mxu0 0
    %126 = vmatprep.mubr.bf16.mxu0 0
    %127 = vmatmul.mubr.bf16.gmra.mxu0 %v92
    %v128 = vpop.f32.mrf.mxu0
    %v129 = vadd.f32 %v71, %v128
    %v130 = vpop.f32.mrf.mxu0
    %v131 = vpop.f32.mrf.mxu0
    %v132 = vadd.f32 %v71, %v131
    %v133 = vpop.f32.mrf.mxu0
    %134 = vdwg.mxu0
    %v135 = vtanh.pop %v129
    %v136 = vtanh.pop %v132
    %v137 = vpack.c.bf16 %v136, %v135
    %v138 = vld [vmem:[#allocation7] sm:$0xf]
    %v139 = vld [vmem:[#allocation7 + $0x4] sm:$0xf]
    %v140 = vld [vmem:[#allocation7 + $0x8] sm:$0xf]
    %v141 = vld [vmem:[#allocation7 + $0xc] sm:$0xf]
    %v146 = vunpack.c.l.b16 %v138
    %v147 = vunpack.c.l.b16 %v139
    %v148 = vunpack.c.l.b16 %v140
    %v149 = vunpack.c.l.b16 %v141
    %v150 = vpack.c.b16 %v147, %v146
    %v151 = vpack.c.b16 %v149, %v148
    %v155 = vsel %vm90, %v137, 0
    %157 = vmatprep.subr.bf16.mxu0 0
    %158 = vmatpush1.bf16.msra.mxu0 0
    %159 = vmatprep.subr.bf16.mxu0 0
    %160 = vmatpush1.bf16.msra.mxu0 0
    %161 = vmatprep.subr.bf16.mxu0 0
    %162 = vmatpush1.bf16.msra.mxu0 0
    %163 = vmatprep.subr.bf16.mxu0 0
    %164 = vmatpush1.bf16.msra.mxu0 0
    %165 = vmatprep.subr.bf16.mxu0 0
    %166 = vmatpush1.bf16.msra.mxu0 0
    %167 = vmatprep.subr.bf16.mxu0 0
    %168 = vmatpush1.bf16.msra.mxu0 0
    %169 = vmatprep.subr.bf16.mxu0 0
    %170 = vmatpush1.bf16.msra.mxu0 %v151
    %171 = vmatprep.subr.bf16.mxu0 0
    %172 = vmatpush1.bf16.msra.mxu0 %v150
    %173 = vmatprep.subr.bf16.mxu0 0
    %174 = vmatpush2.bf16.msra.mxu0 0
    %175 = vmatprep.subr.bf16.mxu0 0
    %176 = vmatpush2.bf16.msra.mxu0 0
    %177 = vmatprep.subr.bf16.mxu0 0
    %178 = vmatpush2.bf16.msra.mxu0 0
    %179 = vmatprep.subr.bf16.mxu0 0
    %180 = vmatpush2.bf16.msra.mxu0 0
    %181 = vmatprep.subr.bf16.mxu0 0
    %182 = vmatpush2.bf16.msra.mxu0 0
    %183 = vmatprep.subr.bf16.mxu0 0
    %184 = vmatpush2.bf16.msra.mxu0 0
    %185 = vmatprep.subr.bf16.mxu0 0
    %186 = vmatpush2.bf16.msra.mxu0 0
    %187 = vmatprep.subr.bf16.mxu0 0
    %188 = vmatpush2.bf16.msra.mxu0 0
    %189 = vmatprep.mubr.bf16.mxu0 0
    %190 = vmatmul.mubr.bf16.gmra.mxu0 %v155
    %v191 = vpop.f32.mrf.mxu0
    %v192 = vadd.f32 0.0, %v191
    %v193 = vpop.f32.mrf.mxu0
    %v194 = vpop.f32.mrf.mxu0
    %v195 = vadd.f32 0.0, %v194
    %v196 = vpop.f32.mrf.mxu0
    %197 = vdwg.mxu0
    %v198 = vsel %vm90, %v192, -inf
    %v199 = vsel %vm90, %v195, -inf
    %v200 = vmax.f32 %v198, %v199
    %v201 = vsub.f32 %v192, %v200
    %v202 = vsub.f32 %v195, %v200
    %v203 = vmul.f32 %v201, 1.442695
    %v204 = vpow.pop %v203
    %v205 = vmul.f32 %v202, 1.442695
    %v206 = vpow.pop %v205
    %v207 = vsel %vm90, %v204, 0.0
    %v208 = vsel %vm90, %v206, 0.0
    %v209 = vadd.f32 %v207, %v208
    %v210 = vrcp.pop %v209
    %v211 = vmul.f32 %v204, %v210
    %v212 = vmul.f32 %v206, %v210
    %v213 = vsel %vm90, %v211, 0.0
    %214 = vadd.xlane.f32.xlu0 %v213
    %v215 = vpop.xlane.xlu0 %214
    %v216 = vsel %vm90, %v212, 0.0
    %217 = vadd.xlane.f32.xlu0 %v216
    %v218 = vpop.xlane.xlu0 %217
    %v219 = vrcp.pop %v215
    %v220 = vmul.f32 %v211, %v219
    %v221 = vrcp.pop %v218
    %v222 = vmul.f32 %v212, %v221
    %223 = vst.msk [vmem:[#allocation8] sm:$0xff] %vm90, %v220
    %224 = vst.msk [vmem:[#allocation8 + $0x8] sm:$0xff] %vm90, %v222
    // Predicated region
    $region30: #{tpu_custom_call.1} parent=1 // pred_check
      _
    $region31: #{tpu_custom_call.1} parent=1 // pred_check_branch
      %226 = sbr.rel (0) target = $region33
    $region32: #{tpu_custom_call.1} parent=1 // pred_region
      %s228 = ssub.s32 256, 256
      %229 = vsyncadd [#allocation4], %s228
      %s230 = sshll.u32 [#allocation8], 4
      %s231 = int_to_ptr.vmem [resolvable:$true] %s230
      %236 = dma.vmem_to_hbm [thread:$0]  %s231, 256, %s4, [#allocation4], 128, 128, 8
    $region33: #{tpu_custom_call.1} parent=1 // pred_fallthru
      _
    // Predicated region
    $region34: #{tpu_custom_call.1} parent=1 // pred_check
      _
    $region35: #{tpu_custom_call.1} parent=1 // pred_check_branch
      %238 = sbr.rel (0) target = $region37
    $region36: #{tpu_custom_call.1} parent=1 // pred_region
      %239 = dma.done [#allocation4], 256
    $region37: #{tpu_custom_call.1} parent=1 // pred_fallthru
      _
    %240 = vsyncpa [#allocation3], 1
    %241 = vsyncpa [#allocation6], 1
    %242 = vsyncpa [#allocation4], 1

</llo_original>
